<compile_context>
chip_gen: v6e
topology: v6e:2x2x1
jax: 0.10.0
libtpu: 0.0.40
codegen_flags: <defaults>
</compile_context>

<pallas_src>
import functools

import jax
import jax.numpy as jnp
from jax.experimental import pallas as pl
from jax.experimental.pallas import tpu as pltpu


def _round_up(n, m):
    return ((n + m - 1) // m) * m


def _spectral_matmul_kernel(x_ref, w_ref, y_ref):
    # x_ref: (TM, B, KP)   -- [xr | xi] per mode, lane-padded contraction dim
    # w_ref: (TM, KP, NP)  -- block-complex weights [[wr, wi], [-wi, wr]], padded
    # y_ref: (TM, B, NP)   -- [real | imag] output, lane-dense
    y_ref[...] = jnp.einsum(
        "mbk,mkn->mbn",
        x_ref[...],
        w_ref[...],
        preferred_element_type=jnp.float32,
    ).astype(y_ref.dtype)


def _compl_mul1d_pallas(x_blk, w_blk, tm):
    """x_blk: (M_pad, B, KP); w_blk: (M_pad, KP, NP) -> (M_pad, B, NP) float32."""
    m_pad, b, kp = x_blk.shape
    np_ = w_blk.shape[-1]
    num_blocks = m_pad // tm
    return pl.pallas_call(
        _spectral_matmul_kernel,
        out_shape=jax.ShapeDtypeStruct((m_pad, b, np_), jnp.float32),
        grid=(num_blocks,),
        in_specs=[
            pl.BlockSpec((tm, b, kp), lambda m: (m, 0, 0)),
            pl.BlockSpec((tm, kp, np_), lambda m: (m, 0, 0)),
        ],
        out_specs=pl.BlockSpec((tm, b, np_), lambda m: (m, 0, 0)),
        compiler_params=pltpu.CompilerParams(
            dimension_semantics=("parallel",),
            vmem_limit_bytes=32 * 1024 * 1024,
        ),
    )(x_blk, w_blk)


@functools.partial(jax.jit, static_argnames=("modes1", "compute_dtype"))
def spectral_conv1d(x, weights_r, weights_i, modes1, compute_dtype=jnp.float32):
    """Forward pass of SpectralConv1d.

    x:         (B, C_in, N) float32   (PyTorch NCL layout)
    weights_r: (C_in, C_out, modes1) float32  (real part of complex weights)
    weights_i: (C_in, C_out, modes1) float32  (imag part of complex weights)
    compute_dtype: MXU input dtype. jnp.bfloat16 is recommended on v6e/v7x
                   (f32 accumulation is kept); default f32 preserves 1e-5 accuracy.
    returns:   (B, C_out, N) float32
    """
    B, Cin, N = x.shape
    Cout = weights_r.shape[1]
    K = N // 2 + 1
    M = modes1

    # ---- FFT (plain JAX; no Pallas FFT primitive) --------------------------
    x_ft = jnp.fft.rfft(x, axis=-1)                  # (B, Cin, K) complex64
    x_low = x_ft[:, :, :M]                           # (B, Cin, M)
    # DC-bin halving, exactly as in the PyTorch forward: x_ft[:, :, 0] *= 0.5
    x_low = x_low.at[:, :, 0].multiply(0.5)

    # ---- Pack complex problem into one real block matmul -------------------
    # X = [xr | xi] along channels, mode-major: (M, B, 2*Cin)
    xcat = jnp.concatenate([jnp.real(x_low), jnp.imag(x_low)], axis=1)  # (B, 2Cin, M)
    X = jnp.transpose(xcat, (2, 0, 1)).astype(jnp.float32)              # (M, B, 2Cin)

    # W = [[wr, wi], [-wi, wr]], mode-major: (M, 2*Cin, 2*Cout)
    top = jnp.concatenate([weights_r, weights_i], axis=1)     # (Cin, 2Cout, M)
    bot = jnp.concatenate([-weights_i, weights_r], axis=1)    # (Cin, 2Cout, M)
    Wb = jnp.concatenate([top, bot], axis=0)                  # (2Cin, 2Cout, M)
    Wb = jnp.transpose(Wb, (2, 0, 1)).astype(jnp.float32)     # (M, 2Cin, 2Cout)

    # ---- Pad to TPU-friendly tiles ------------------------------------------
    KP = _round_up(2 * Cin, 128)          # contraction dim / X lane dim
    NP = _round_up(2 * Cout, 128)         # output lane dim (dense stores)
    TM = min(128, max(1, (M + 1) // 2))   # >=2 mode blocks when possible (v7x megacore)
    num_blocks = -(-M // TM)
    M_pad = TM * num_blocks

    X = jnp.pad(X, ((0, M_pad - M), (0, 0), (0, KP - 2 * Cin)))
    Wb = jnp.pad(Wb, ((0, M_pad - M), (0, KP - 2 * Cin), (0, NP - 2 * Cout)))
    X = X.astype(compute_dtype)
    Wb = Wb.astype(compute_dtype)

    # ---- Pallas: fused complex channel mixing (the learned linear transform) -
    Y = _compl_mul1d_pallas(X, Wb, TM)                        # (M_pad, B, NP) f32

    # ---- Unpack, zero-pad the spectrum, inverse FFT --------------------------
    yr = jnp.transpose(Y[:M, :, :Cout], (1, 2, 0))            # (B, Cout, M)
    yi = jnp.transpose(Y[:M, :, Cout:2 * Cout], (1, 2, 0))    # (B, Cout, M)
    out_low = (yr + 1j * yi).astype(jnp.complex64)
    out_ft = jnp.pad(out_low, ((0, 0), (0, 0), (0, K - M)))   # (B, Cout, K)
    return jnp.fft.irfft(out_ft, n=N, axis=-1)                # (B, Cout, N) float32


def _reference_forward(x, weights_r, weights_i, modes1):
    """Pure-JAX mirror of the PyTorch forward (for correctness checking)."""
    B, Cin, N = x.shape
    Cout = weights_r.shape[1]
    K = N // 2 + 1
    w = (weights_r + 1j * weights_i).astype(jnp.complex64)
    x_ft = jnp.fft.rfft(x, axis=-1)
    x_ft = x_ft.at[:, :, 0].multiply(0.5)
    out_low = jnp.einsum('bix,iox->box', x_ft[:, :, :modes1], w)
    out_ft = jnp.zeros((B, Cout, K), dtype=jnp.complex64)
    out_ft = out_ft.at[:, :, :modes1].set(out_low)
    return jnp.fft.irfft(out_ft, n=N, axis=-1)


if __name__ == "__main__":
    # Small shapes consistent with the module: batch=2, in_ch=4, out_ch=4, N=16, modes1=6.
    B, Cin, Cout, N, modes1 = 2, 4, 4, 16, 6

    key = jax.random.PRNGKey(0)
    kx, kwr, kwi = jax.random.split(key, 3)

    x = jax.random.normal(kx, (B, Cin, N), dtype=jnp.float32)

    # Parameter init mirrors: scale * torch.rand(in, out, modes, dtype=cfloat)
    scale = 1.0 / (Cin * Cout)
    weights_r = scale * jax.random.uniform(kwr, (Cin, Cout, modes1), dtype=jnp.float32)
    weights_i = scale * jax.random.uniform(kwi, (Cin, Cout, modes1), dtype=jnp.float32)

    out = spectral_conv1d(x, weights_r, weights_i, modes1=modes1)
    out = jax.block_until_ready(out)

    ref = jax.block_until_ready(_reference_forward(x, weights_r, weights_i, modes1))

    assert out.shape == (B, Cout, N), out.shape
    err = float(jnp.max(jnp.abs(out - ref)))
    assert jnp.allclose(out, ref, atol=1e-5, rtol=1e-5), err

    print("KERNEL_OK")
</pallas_src>

<mosaic_0001>
module attributes {stable_mosaic.version = 11 : i64} {
  func.func @_spectral_matmul_kernel(%arg0: i32, %arg1: memref<3x2x128xf32, #tpu.memory_space<vmem>>, %arg2: memref<3x128x128xf32, #tpu.memory_space<vmem>>, %arg3: memref<3x2x128xf32, #tpu.memory_space<vmem>>) attributes {dimension_semantics = [#tpu.dimension_semantics<parallel>], iteration_bounds = array<i64: 2>, scalar_prefetch = 0 : i64, scratch_operands = 0 : i64, tpu.core_type = #tpu.core_type<tc>, window_params = [{transform_indices = @transform_0, window_bounds = array<i64: 3, 2, 128>}, {transform_indices = @transform_1, window_bounds = array<i64: 3, 128, 128>}, {transform_indices = @transform_2, window_bounds = array<i64: 3, 2, 128>}]} {
    %c0 = arith.constant 0 : index
    %c0_0 = arith.constant 0 : index
    %c0_1 = arith.constant 0 : index
    %0 = vector.load %arg1[%c0, %c0_0, %c0_1] : memref<3x2x128xf32, #tpu.memory_space<vmem>>, vector<3x2x128xf32>
    %c0_2 = arith.constant 0 : index
    %c0_3 = arith.constant 0 : index
    %c0_4 = arith.constant 0 : index
    %1 = vector.load %arg2[%c0_2, %c0_3, %c0_4] : memref<3x128x128xf32, #tpu.memory_space<vmem>>, vector<3x128x128xf32>
    "tpu.trace_start"() <{level = 10 : i32, message = "mbk,mkn->mbn"}> : () -> ()
    %cst = arith.constant dense<0.000000e+00> : vector<3x2x128xf32>
    %2 = tpu.matmul %0, %1, %cst {dimension_numbers = #tpu.dot_dimension_numbers<[2], [1], [1], [2], [0, 0, 0, 1, 1, 2], [0], [0]>} : vector<3x2x128xf32>, vector<3x128x128xf32>, vector<3x2x128xf32> -> vector<3x2x128xf32>
    "tpu.trace_stop"() : () -> ()
    %c0_5 = arith.constant 0 : index
    %c0_6 = arith.constant 0 : index
    %c0_7 = arith.constant 0 : index
    %3 = vector.load %arg3[%c0_5, %c0_6, %c0_7] : memref<3x2x128xf32, #tpu.memory_space<vmem>>, vector<3x2x128xf32>
    tpu.vector_store %arg3[%c0_5, %c0_6, %c0_7], %2 {strides = array<i32>} : memref<3x2x128xf32, #tpu.memory_space<vmem>>, vector<3x2x128xf32>,
    return
  }
  func.func @transform_0(%arg0: i32) -> (i32, i32, i32) {
    %c0_i32 = arith.constant 0 : i32
    %c0_i32_0 = arith.constant 0 : i32
    %c0_i32_1 = arith.constant 0 : i32
    return %arg0, %c0_i32, %c0_i32_0 : i32, i32, i32
  }
  func.func @transform_1(%arg0: i32) -> (i32, i32, i32) {
    %c0_i32 = arith.constant 0 : i32
    %c0_i32_0 = arith.constant 0 : i32
    %c0_i32_1 = arith.constant 0 : i32
    return %arg0, %c0_i32, %c0_i32_0 : i32, i32, i32
  }
  func.func @transform_2(%arg0: i32) -> (i32, i32, i32) {
    %c0_i32 = arith.constant 0 : i32
    %c0_i32_0 = arith.constant 0 : i32
    %c0_i32_1 = arith.constant 0 : i32
    return %arg0, %c0_i32, %c0_i32_0 : i32, i32, i32
  }
}

</mosaic_0001>

<llo_original>
// kernel: neg.1
$region0: #{neg.1}
  #allocation0 [shape = 's32[1]{0}', space=sflag, size = 0x4, scoped, tag = 'scoped memory for neg.1']
  %s0 = inlined_call_operand.vmem [shape: f32[4,4,6], index: 0, kind: input, shape index: {}]
  %s1 = inlined_call_operand.vmem [shape: f32[4,4,6], index: 1, kind: output, shape index: {}]
  %v2 = vld [vmem:[%s0] sm:$0xf]
  %3 = xla_tuple %v2
  %4 = xla_tuple %3
  %v5 = vxor.u32 %v2, 2147483648
  %6 = xla_tuple %v5
  %7 = vst [vmem:[%s1] sm:$0xf] %v5
  %s8 = scalar_lea.vmem %s0, 4
  %v9 = vld [vmem:[%s8] sm:$0xf]
  %10 = xla_tuple %v9
  %11 = xla_tuple %10
  %v12 = vxor.u32 %v9, 2147483648
  %13 = xla_tuple %v12
  %s14 = scalar_lea.vmem %s1, 4
  %15 = vst [vmem:[%s14] sm:$0xf] %v12
  %s16 = scalar_lea.vmem %s0, 8
  %v17 = vld [vmem:[%s16] sm:$0xf]
  %18 = xla_tuple %v17
  %19 = xla_tuple %18
  %v20 = vxor.u32 %v17, 2147483648
  %21 = xla_tuple %v20
  %s22 = scalar_lea.vmem %s1, 8
  %23 = vst [vmem:[%s22] sm:$0xf] %v20
  %s24 = scalar_lea.vmem %s0, 12
  %v25 = vld [vmem:[%s24] sm:$0xf]
  %26 = xla_tuple %v25
  %27 = xla_tuple %26
  %v28 = vxor.u32 %v25, 2147483648
  %29 = xla_tuple %v28
  %s30 = scalar_lea.vmem %s1, 12
  %31 = vst [vmem:[%s30] sm:$0xf] %v28

// kernel: reverse.1
$region0: #{reverse.1}
  #allocation0 [shape = 's32[1]{0}', space=sflag, size = 0x4, scoped, tag = 'scoped memory for reverse.1']
  %s0 = inlined_call_operand.vmem [shape: f32[2,4,7], index: 0, kind: input, shape index: {}]
  %s1 = inlined_call_operand.vmem [shape: f32[2,4,7], index: 1, kind: output, shape index: {}]
  %s2 = scalar_lea.vmem %s0, 12
  %v3 = vld [vmem:[%s2] sm:$0x3]
  %4 = vst [vmem:[%s1] sm:$0x3] %v3
  %s5 = scalar_lea.vmem %s0, 10
  %v6 = vld [vmem:[%s5] sm:$0x3]
  %s7 = scalar_lea.vmem %s1, 2
  %8 = vst [vmem:[%s7] sm:$0x3] %v6
  %s9 = scalar_lea.vmem %s0, 8
  %v10 = vld [vmem:[%s9] sm:$0x3]
  %s11 = scalar_lea.vmem %s1, 4
  %12 = vst [vmem:[%s11] sm:$0x3] %v10
  %s13 = scalar_lea.vmem %s0, 6
  %v14 = vld [vmem:[%s13] sm:$0x3]
  %s15 = scalar_lea.vmem %s1, 6
  %16 = vst [vmem:[%s15] sm:$0x3] %v14
  %s17 = scalar_lea.vmem %s0, 4
  %v18 = vld [vmem:[%s17] sm:$0x3]
  %s19 = scalar_lea.vmem %s1, 8
  %20 = vst [vmem:[%s19] sm:$0x3] %v18
  %s21 = scalar_lea.vmem %s0, 2
  %v22 = vld [vmem:[%s21] sm:$0x3]
  %s23 = scalar_lea.vmem %s1, 10
  %24 = vst [vmem:[%s23] sm:$0x3] %v22
  %v25 = vld [vmem:[%s0] sm:$0x3]
  %s26 = scalar_lea.vmem %s1, 12
  %27 = vst [vmem:[%s26] sm:$0x3] %v25

// kernel: spectral_conv1d.1
$region0: #{spectral_conv1d.1}
  #allocation0 [shape = 'u32[]', space=smem, size = 0x4, offset = 0x4, fixed_abs, tag = 'smem constant byte address 0x4 - core index']
  #allocation1 [shape = 'u32[144,128]{1,0:T(1,128)}', space=vmem, size = 0x12000, scoped, tag = 'internal scratch']
  %s0 = inlined_call_operand.vmem [shape: f32[6,2,128], index: 0, kind: input, shape index: {}]
  %s1 = inlined_call_operand.vmem [shape: f32[6,128,128], index: 1, kind: input, shape index: {}]
  %s2 = inlined_call_operand.vmem [shape: f32[6,2,128], index: 2, kind: output, shape index: {}]
  %s3 = sld [smem:[#allocation0]]
  $region41: #{spectral_conv1d.1} parent=0
    _
  %s5 = ssub.s32 1, %s3
  %s6 = scalar_select 0, %s5, %s3
  loop: start=0, step=1, limit=4
  $region2: #{spectral_conv1d.1} parent=0 // loop_pre_header
    _
  $region3: #{spectral_conv1d.1} parent=0 // loop_header
    %s8 = sphi 0, %s12
    %p9 = scmp.ge.s32.totalorder %s8, 4
    %s18 = sphi 0, %s20
    %s21 = sphi 0, %s18
    %s22 = sphi 0, %s21
    %s38 = sphi 0, %s22
    %s44 = sphi 0, %s46
    %s47 = sphi 0, %s44
    %s48 = sphi 0, %s47
    %s64 = sphi 0, %s48
    %s70 = sphi 0, %s72
    %s73 = sphi 0, %s70
    %s74 = sphi 0, %s73
    %s90 = sphi 0, %s74
  $region4: #{spectral_conv1d.1} parent=0 // loop_header_branch
    %11 = sbr.rel (%p9) target = $region8
  $region5: #{spectral_conv1d.1} parent=0 // loop_body
    %s13 = ssub.s32 %s8, 1
    %s14 = ssub.s32 %s8, 2
    %s15 = sadd.s32 %s8, 1
    %s16 = ssub.s32 %s8, %s15
    %p17 = scmp.eq.s32.totalorder %s16, 0
    %s19 = sadd.s32 %s18, 1
    %s20 = scalar_select %p17, %s18, %s19
    %p23 = pneg %p17
    %p24 = scmp.eq.s32.totalorder %s8, 1
    %p25 = por %p23, %p24
    %p26 = scmp.ne.s32.totalorder %s18, %s21
    %p27 = scmp.eq.s32.totalorder %s8, 0
    %p28 = por %p26, %p27
    %p29 = scmp.ne.s32.totalorder %s18, %s21
    %p30 = scmp.eq.s32.totalorder %s13, 1
    %p31 = por %p29, %p30
    %p32 = scmp.ne.s32.totalorder %s21, %s22
    %p33 = scmp.eq.s32.totalorder %s13, 0
    %p34 = por %p32, %p33
    %p35 = scmp.ne.s32.totalorder %s21, %s22
    %p36 = scmp.eq.s32.totalorder %s14, 1
    %p37 = por %p35, %p36
    %p39 = scmp.ne.s32.totalorder %s22, %s38
    %p40 = scmp.eq.s32.totalorder %s14, 0
    %p41 = por %p39, %p40
    %s42 = ssub.s32 %s8, %s15
    %p43 = scmp.eq.s32.totalorder %s42, 0
    %s45 = sadd.s32 %s44, 1
    %s46 = scalar_select %p43, %s44, %s45
    %p49 = pneg %p43
    %p50 = scmp.eq.s32.totalorder %s8, 1
    %p51 = por %p49, %p50
    %p52 = scmp.ne.s32.totalorder %s44, %s47
    %p53 = scmp.eq.s32.totalorder %s8, 0
    %p54 = por %p52, %p53
    %p55 = scmp.ne.s32.totalorder %s44, %s47
    %p56 = scmp.eq.s32.totalorder %s13, 1
    %p57 = por %p55, %p56
    %p58 = scmp.ne.s32.totalorder %s47, %s48
    %p59 = scmp.eq.s32.totalorder %s13, 0
    %p60 = por %p58, %p59
    %p61 = scmp.ne.s32.totalorder %s47, %s48
    %p62 = scmp.eq.s32.totalorder %s14, 1
    %p63 = por %p61, %p62
    %p65 = scmp.ne.s32.totalorder %s48, %s64
    %p66 = scmp.eq.s32.totalorder %s14, 0
    %p67 = por %p65, %p66
    %s68 = ssub.s32 %s8, %s15
    %p69 = scmp.eq.s32.totalorder %s68, 0
    %s71 = sadd.s32 %s70, 1
    %s72 = scalar_select %p69, %s70, %s71
    %p75 = pneg %p69
    %p76 = scmp.eq.s32.totalorder %s8, 1
    %p77 = por %p75, %p76
    %p78 = scmp.ne.s32.totalorder %s70, %s73
    %p79 = scmp.eq.s32.totalorder %s8, 0
    %p80 = por %p78, %p79
    %p81 = scmp.ne.s32.totalorder %s70, %s73
    %p82 = scmp.eq.s32.totalorder %s13, 1
    %p83 = por %p81, %p82
    %p84 = scmp.ne.s32.totalorder %s73, %s74
    %p85 = scmp.eq.s32.totalorder %s13, 0
    %p86 = por %p84, %p85
    %p87 = scmp.ne.s32.totalorder %s73, %s74
    %p88 = scmp.eq.s32.totalorder %s14, 1
    %p89 = por %p87, %p88
    %p91 = scmp.ne.s32.totalorder %s74, %s90
    %p92 = scmp.eq.s32.totalorder %s14, 0
    %p93 = por %p91, %p92
    %p94 = scmp.le.s32.totalorder 1, %s8
    %p95 = scmp.lt.s32.totalorder %s8, 3
    %p96 = pnand %p94, %p95
    %p97 = pneg %p96
    // Predicated region
    $region9: #{spectral_conv1d.1} parent=5 // pred_check
      _
    $region10: #{spectral_conv1d.1} parent=5 // pred_check_branch
      %99 = sbr.rel (%p96) target = $region12
    $region11: #{spectral_conv1d.1} parent=5 // pred_region
      %s100 = ssub.s32 %s8, 1
    $region12: #{spectral_conv1d.1} parent=5 // pred_fallthru
      _
    %p101 = scmp.lt.s32.totalorder %s8, 2
    // Predicated region
    $region13: #{spectral_conv1d.1} parent=5 // pred_check
      %p102 = pneg %p101
    $region14: #{spectral_conv1d.1} parent=5 // pred_check_branch
      %104 = sbr.rel (%p102) target = $region16
    $region15: #{spectral_conv1d.1} parent=5 // pred_region
      // Predicated region
      $region17: #{spectral_conv1d.1} parent=15 // pred_check
        %p105 = pneg %p28
      $region18: #{spectral_conv1d.1} parent=15 // pred_check_branch
        %107 = sbr.rel (%p105) target = $region20
      $region19: #{spectral_conv1d.1} parent=15 // pred_region
        %s108 = smul.u32 3, %s8
        %p109 = scmp.lt.s32.totalorder %s108, 5
        %s110 = scalar_select %p109, %s108, 5
        %s111 = smul.addr %s110, 2
        %s112 = scalar_lea.vmem %s0, %s111
        %s113 = smul.u32 3, %s8
      $region20: #{spectral_conv1d.1} parent=15 // pred_fallthru
        _
      // Predicated region
      $region21: #{spectral_conv1d.1} parent=15 // pred_check
        %p114 = pneg %p54
      $region22: #{spectral_conv1d.1} parent=15 // pred_check_branch
        %116 = sbr.rel (%p114) target = $region24
      $region23: #{spectral_conv1d.1} parent=15 // pred_region
        %s117 = smul.u32 3, %s8
        %p118 = scmp.lt.s32.totalorder %s117, 5
        %s119 = scalar_select %p118, %s117, 5
        %s120 = smul.addr %s119, 16
        %s121 = smul.addr %s120, 8
        %s122 = scalar_lea.vmem %s1, %s121
        %s123 = smul.u32 3, %s8
      $region24: #{spectral_conv1d.1} parent=15 // pred_fallthru
        _
    $region16: #{spectral_conv1d.1} parent=5 // pred_fallthru
      _
    %p124 = scmp.le.s32.totalorder 1, %s8
    %p125 = scmp.lt.s32.totalorder %s8, 3
    %p126 = pnand %p124, %p125
    %p127 = pneg %p126
    // Predicated region
    $region25: #{spectral_conv1d.1} parent=5 // pred_check
      _
    $region26: #{spectral_conv1d.1} parent=5 // pred_check_branch
      %129 = sbr.rel (%p126) target = $region28
    $region27: #{spectral_conv1d.1} parent=5 // pred_region
      %s130 = ssub.s32 %s8, 1
      %s131 = smul.u32 3, %s13
      %p132 = scmp.lt.s32.totalorder %s131, 5
      %s133 = scalar_select %p132, %s131, 5
      %s134 = smul.addr %s133, 2
      %s135 = scalar_lea.vmem %s0, %s134
      %p136 = pneg %p34
      %p137 = pneg %p31
      %s138 = smul.u32 3, %s13
      %p139 = scmp.lt.s32.totalorder %s138, 5
      %s140 = scalar_select %p139, %s138, 5
      %s141 = smul.addr %s140, 16
      %s142 = smul.addr %s141, 8
      %s143 = scalar_lea.vmem %s1, %s142
      %p144 = pneg %p60
      %p145 = pneg %p57
      %p146 = pneg %p86
      %p147 = pneg %p83
      %s148 = smul.u32 3, %s13
      %p149 = scmp.lt.s32.totalorder %s148, 5
      %s150 = scalar_select %p149, %s148, 5
      %s151 = smul.addr %s150, 2
      %s152 = scalar_lea.vmem %s2, %s151
      %s153 = smul.u32 3, %s13
      %p154 = scmp.lt.s32.totalorder %s153, 5
      %s155 = scalar_select %p154, %s153, 5
      %s156 = smul.addr %s155, 2
      %s157 = scalar_lea.vmem %s0, %s156
      %s158 = smul.u32 3, %s13
      %s159 = smul.u32 3, %s13
      %p160 = scmp.lt.s32.totalorder %s159, 5
      %s161 = scalar_select %p160, %s159, 5
      %s162 = smul.addr %s161, 16
      %s163 = smul.addr %s162, 8
      %s164 = scalar_lea.vmem %s1, %s163
      %s165 = smul.u32 3, %s13
      %s166 = smul.u32 3, %s13
      %p167 = scmp.lt.s32.totalorder %s166, 5
      %s168 = scalar_select %p167, %s166, 5
      %s169 = smul.addr %s168, 2
      %s170 = scalar_lea.vmem %s2, %s169
      %s171 = smul.u32 3, %s13
      %v172 = vld [vmem:[%s157] sm:$0x3]
      %v173 = vld [vmem:[%s157 + $0x2] sm:$0x3]
      %v174 = vld [vmem:[%s157 + $0x4] sm:$0x3]
      %v175 = vld [vmem:[%s164] sm:$0xff]
      %v176 = vld [vmem:[%s164 + $0x8] sm:$0xff]
      %v177 = vld [vmem:[%s164 + $0x10] sm:$0xff]
      %v178 = vld [vmem:[%s164 + $0x18] sm:$0xff]
      %v179 = vld [vmem:[%s164 + $0x20] sm:$0xff]
      %v180 = vld [vmem:[%s164 + $0x28] sm:$0xff]
      %v181 = vld [vmem:[%s164 + $0x30] sm:$0xff]
      %v182 = vld [vmem:[%s164 + $0x38] sm:$0xff]
      %v183 = vld [vmem:[%s164 + $0x40] sm:$0xff]
      %v184 = vld [vmem:[%s164 + $0x48] sm:$0xff]
      %v185 = vld [vmem:[%s164 + $0x50] sm:$0xff]
      %v186 = vld [vmem:[%s164 + $0x58] sm:$0xff]
      %v187 = vld [vmem:[%s164 + $0x60] sm:$0xff]
      %v188 = vld [vmem:[%s164 + $0x68] sm:$0xff]
      %v189 = vld [vmem:[%s164 + $0x70] sm:$0xff]
      %v190 = vld [vmem:[%s164 + $0x78] sm:$0xff]
      %v191 = vld [vmem:[%s164 + $0x80] sm:$0xff]
      %v192 = vld [vmem:[%s164 + $0x88] sm:$0xff]
      %v193 = vld [vmem:[%s164 + $0x90] sm:$0xff]
      %v194 = vld [vmem:[%s164 + $0x98] sm:$0xff]
      %v195 = vld [vmem:[%s164 + $0xa0] sm:$0xff]
      %v196 = vld [vmem:[%s164 + $0xa8] sm:$0xff]
      %v197 = vld [vmem:[%s164 + $0xb0] sm:$0xff]
      %v198 = vld [vmem:[%s164 + $0xb8] sm:$0xff]
      %v199 = vld [vmem:[%s164 + $0xc0] sm:$0xff]
      %v200 = vld [vmem:[%s164 + $0xc8] sm:$0xff]
      %v201 = vld [vmem:[%s164 + $0xd0] sm:$0xff]
      %v202 = vld [vmem:[%s164 + $0xd8] sm:$0xff]
      %v203 = vld [vmem:[%s164 + $0xe0] sm:$0xff]
      %v204 = vld [vmem:[%s164 + $0xe8] sm:$0xff]
      %v205 = vld [vmem:[%s164 + $0xf0] sm:$0xff]
      %v206 = vld [vmem:[%s164 + $0xf8] sm:$0xff]
      %v207 = vld [vmem:[%s164 + $0x100] sm:$0xff]
      %v208 = vld [vmem:[%s164 + $0x108] sm:$0xff]
      %v209 = vld [vmem:[%s164 + $0x110] sm:$0xff]
      %v210 = vld [vmem:[%s164 + $0x118] sm:$0xff]
      %v211 = vld [vmem:[%s164 + $0x120] sm:$0xff]
      %v212 = vld [vmem:[%s164 + $0x128] sm:$0xff]
      %v213 = vld [vmem:[%s164 + $0x130] sm:$0xff]
      %v214 = vld [vmem:[%s164 + $0x138] sm:$0xff]
      %v215 = vld [vmem:[%s164 + $0x140] sm:$0xff]
      %v216 = vld [vmem:[%s164 + $0x148] sm:$0xff]
      %v217 = vld [vmem:[%s164 + $0x150] sm:$0xff]
      %v218 = vld [vmem:[%s164 + $0x158] sm:$0xff]
      %v219 = vld [vmem:[%s164 + $0x160] sm:$0xff]
      %v220 = vld [vmem:[%s164 + $0x168] sm:$0xff]
      %v221 = vld [vmem:[%s164 + $0x170] sm:$0xff]
      %v222 = vld [vmem:[%s164 + $0x178] sm:$0xff]
      %223 = vmatprep.subr.mxu0 0.0
      %224 = vmatpush1.msra.mxu0 %v190
      %225 = vmatprep.subr.mxu0 0.0
      %226 = vmatpush1.msra.mxu0 %v189
      %227 = vmatprep.subr.mxu0 0.0
      %228 = vmatpush1.msra.mxu0 %v188
      %229 = vmatprep.subr.mxu0 0.0
      %230 = vmatpush1.msra.mxu0 %v187
      %231 = vmatprep.subr.mxu0 0.0
      %232 = vmatpush1.msra.mxu0 %v186
      %233 = vmatprep.subr.mxu0 0.0
      %234 = vmatpush1.msra.mxu0 %v185
      %235 = vmatprep.subr.mxu0 0.0
      %236 = vmatpush1.msra.mxu0 %v184
      %237 = vmatprep.subr.mxu0 0.0
      %238 = vmatpush1.msra.mxu0 %v183
      %239 = vmatprep.subr.mxu0 0.0
      %240 = vmatpush1.msra.mxu0 %v182
      %241 = vmatprep.subr.mxu0 0.0
      %242 = vmatpush1.msra.mxu0 %v181
      %243 = vmatprep.subr.mxu0 0.0
      %244 = vmatpush1.msra.mxu0 %v180
      %245 = vmatprep.subr.mxu0 0.0
      %246 = vmatpush1.msra.mxu0 %v179
      %247 = vmatprep.subr.mxu0 0.0
      %248 = vmatpush1.msra.mxu0 %v178
      %249 = vmatprep.subr.mxu0 0.0
      %250 = vmatpush1.msra.mxu0 %v177
      %251 = vmatprep.subr.mxu0 0.0
      %252 = vmatpush1.msra.mxu0 %v176
      %253 = vmatprep.subr.mxu0 0.0
      %254 = vmatpush1.msra.mxu0 %v175
      %255 = vmatprep.subr.mxu0 0.0
      %256 = vmatpush2.msra.mxu0 0.0
      %257 = vmatprep.subr.mxu0 0.0
      %258 = vmatpush2.msra.mxu0 0.0
      %259 = vmatprep.subr.mxu0 0.0
      %260 = vmatpush2.msra.mxu0 0.0
      %261 = vmatprep.subr.mxu0 0.0
      %262 = vmatpush2.msra.mxu0 0.0
      %263 = vmatprep.subr.mxu0 0.0
      %264 = vmatpush2.msra.mxu0 0.0
      %265 = vmatprep.subr.mxu0 0.0
      %266 = vmatpush2.msra.mxu0 0.0
      %267 = vmatprep.subr.mxu0 0.0
      %268 = vmatpush2.msra.mxu0 0.0
      %269 = vmatprep.subr.mxu0 0.0
      %270 = vmatpush2.msra.mxu0 0.0
      %271 = vmatprep.subr.mxu0 0.0
      %272 = vmatpush2.msra.mxu0 0.0
      %273 = vmatprep.subr.mxu0 0.0
      %274 = vmatpush2.msra.mxu0 0.0
      %275 = vmatprep.subr.mxu0 0.0
      %276 = vmatpush2.msra.mxu0 0.0
      %277 = vmatprep.subr.mxu0 0.0
      %278 = vmatpush2.msra.mxu0 0.0
      %279 = vmatprep.subr.mxu0 0.0
      %280 = vmatpush2.msra.mxu0 0.0
      %281 = vmatprep.subr.mxu0 0.0
      %282 = vmatpush2.msra.mxu0 0.0
      %283 = vmatprep.subr.mxu0 0.0
      %284 = vmatpush2.msra.mxu0 0.0
      %285 = vmatprep.subr.mxu0 0.0
      %286 = vmatpush2.msra.mxu0 0.0
      %287 = vmatprep.mubr.f32.mxu0 0.0
      %288 = vmatmul.mubr.f32.gmra.mxu0 %v172
      %v289 = vpop.f32.mrf.mxu0
      %v290 = vadd.f32 0.0, %v289
      %v291 = vpop.f32.mrf.mxu0
      %292 = vdwg.mxu0
      %293 = vmatprep.subr.mxu0 0.0
      %294 = vmatpush1.msra.mxu0 %v206
      %295 = vmatprep.subr.mxu0 0.0
      %296 = vmatpush1.msra.mxu0 %v205
      %297 = vmatprep.subr.mxu0 0.0
      %298 = vmatpush1.msra.mxu0 %v204
      %299 = vmatprep.subr.mxu0 0.0
      %300 = vmatpush1.msra.mxu0 %v203
      %301 = vmatprep.subr.mxu0 0.0
      %302 = vmatpush1.msra.mxu0 %v202
      %303 = vmatprep.subr.mxu0 0.0
      %304 = vmatpush1.msra.mxu0 %v201
      %305 = vmatprep.subr.mxu0 0.0
      %306 = vmatpush1.msra.mxu0 %v200
      %307 = vmatprep.subr.mxu0 0.0
      %308 = vmatpush1.msra.mxu0 %v199
      %309 = vmatprep.subr.mxu0 0.0
      %310 = vmatpush1.msra.mxu0 %v198
      %311 = vmatprep.subr.mxu0 0.0
      %312 = vmatpush1.msra.mxu0 %v197
      %313 = vmatprep.subr.mxu0 0.0
      %314 = vmatpush1.msra.mxu0 %v196
      %315 = vmatprep.subr.mxu0 0.0
      %316 = vmatpush1.msra.mxu0 %v195
      %317 = vmatprep.subr.mxu0 0.0
      %318 = vmatpush1.msra.mxu0 %v194
      %319 = vmatprep.subr.mxu0 0.0
      %320 = vmatpush1.msra.mxu0 %v193
      %321 = vmatprep.subr.mxu0 0.0
      %322 = vmatpush1.msra.mxu0 %v192
      %323 = vmatprep.subr.mxu0 0.0
      %324 = vmatpush1.msra.mxu0 %v191
      %325 = vmatprep.subr.mxu0 0.0
      %326 = vmatpush2.msra.mxu0 0.0
      %327 = vmatprep.subr.mxu0 0.0
      %328 = vmatpush2.msra.mxu0 0.0
      %329 = vmatprep.subr.mxu0 0.0
      %330 = vmatpush2.msra.mxu0 0.0
      %331 = vmatprep.subr.mxu0 0.0
      %332 = vmatpush2.msra.mxu0 0.0
      %333 = vmatprep.subr.mxu0 0.0
      %334 = vmatpush2.msra.mxu0 0.0
      %335 = vmatprep.subr.mxu0 0.0
      %336 = vmatpush2.msra.mxu0 0.0
      %337 = vmatprep.subr.mxu0 0.0
      %338 = vmatpush2.msra.mxu0 0.0
      %339 = vmatprep.subr.mxu0 0.0
      %340 = vmatpush2.msra.mxu0 0.0
      %341 = vmatprep.subr.mxu0 0.0
      %342 = vmatpush2.msra.mxu0 0.0
      %343 = vmatprep.subr.mxu0 0.0
      %344 = vmatpush2.msra.mxu0 0.0
      %345 = vmatprep.subr.mxu0 0.0
      %346 = vmatpush2.msra.mxu0 0.0
      %347 = vmatprep.subr.mxu0 0.0
      %348 = vmatpush2.msra.mxu0 0.0
      %349 = vmatprep.subr.mxu0 0.0
      %350 = vmatpush2.msra.mxu0 0.0
      %351 = vmatprep.subr.mxu0 0.0
      %352 = vmatpush2.msra.mxu0 0.0
      %353 = vmatprep.subr.mxu0 0.0
      %354 = vmatpush2.msra.mxu0 0.0
      %355 = vmatprep.subr.mxu0 0.0
      %356 = vmatpush2.msra.mxu0 0.0
      %357 = vmatprep.mubr.f32.mxu0 0.0
      %358 = vmatmul.mubr.f32.gmra.mxu0 %v173
      %v359 = vpop.f32.mrf.mxu0
      %v360 = vadd.f32 0.0, %v359
      %v361 = vpop.f32.mrf.mxu0
      %362 = vdwg.mxu0
      %363 = vmatprep.subr.mxu0 0.0
      %364 = vmatpush1.msra.mxu0 %v222
      %365 = vmatprep.subr.mxu0 0.0
      %366 = vmatpush1.msra.mxu0 %v221
      %367 = vmatprep.subr.mxu0 0.0
      %368 = vmatpush1.msra.mxu0 %v220
      %369 = vmatprep.subr.mxu0 0.0
      %370 = vmatpush1.msra.mxu0 %v219
      %371 = vmatprep.subr.mxu0 0.0
      %372 = vmatpush1.msra.mxu0 %v218
      %373 = vmatprep.subr.mxu0 0.0
      %374 = vmatpush1.msra.mxu0 %v217
      %375 = vmatprep.subr.mxu0 0.0
      %376 = vmatpush1.msra.mxu0 %v216
      %377 = vmatprep.subr.mxu0 0.0
      %378 = vmatpush1.msra.mxu0 %v215
      %379 = vmatprep.subr.mxu0 0.0
      %380 = vmatpush1.msra.mxu0 %v214
      %381 = vmatprep.subr.mxu0 0.0
      %382 = vmatpush1.msra.mxu0 %v213
      %383 = vmatprep.subr.mxu0 0.0
      %384 = vmatpush1.msra.mxu0 %v212
      %385 = vmatprep.subr.mxu0 0.0
      %386 = vmatpush1.msra.mxu0 %v211
      %387 = vmatprep.subr.mxu0 0.0
      %388 = vmatpush1.msra.mxu0 %v210
      %389 = vmatprep.subr.mxu0 0.0
      %390 = vmatpush1.msra.mxu0 %v209
      %391 = vmatprep.subr.mxu0 0.0
      %392 = vmatpush1.msra.mxu0 %v208
      %393 = vmatprep.subr.mxu0 0.0
      %394 = vmatpush1.msra.mxu0 %v207
      %395 = vmatprep.subr.mxu0 0.0
      %396 = vmatpush2.msra.mxu0 0.0
      %397 = vmatprep.subr.mxu0 0.0
      %398 = vmatpush2.msra.mxu0 0.0
      %399 = vmatprep.subr.mxu0 0.0
      %400 = vmatpush2.msra.mxu0 0.0
      %401 = vmatprep.subr.mxu0 0.0
      %402 = vmatpush2.msra.mxu0 0.0
      %403 = vmatprep.subr.mxu0 0.0
      %404 = vmatpush2.msra.mxu0 0.0
      %405 = vmatprep.subr.mxu0 0.0
      %406 = vmatpush2.msra.mxu0 0.0
      %407 = vmatprep.subr.mxu0 0.0
      %408 = vmatpush2.msra.mxu0 0.0
      %409 = vmatprep.subr.mxu0 0.0
      %410 = vmatpush2.msra.mxu0 0.0
      %411 = vmatprep.subr.mxu0 0.0
      %412 = vmatpush2.msra.mxu0 0.0
      %413 = vmatprep.subr.mxu0 0.0
      %414 = vmatpush2.msra.mxu0 0.0
      %415 = vmatprep.subr.mxu0 0.0
      %416 = vmatpush2.msra.mxu0 0.0
      %417 = vmatprep.subr.mxu0 0.0
      %418 = vmatpush2.msra.mxu0 0.0
      %419 = vmatprep.subr.mxu0 0.0
      %420 = vmatpush2.msra.mxu0 0.0
      %421 = vmatprep.subr.mxu0 0.0
      %422 = vmatpush2.msra.mxu0 0.0
      %423 = vmatprep.subr.mxu0 0.0
      %424 = vmatpush2.msra.mxu0 0.0
      %425 = vmatprep.subr.mxu0 0.0
      %426 = vmatpush2.msra.mxu0 0.0
      %427 = vmatprep.mubr.f32.mxu0 0.0
      %428 = vmatmul.mubr.f32.gmra.mxu0 %v174
      %v429 = vpop.f32.mrf.mxu0
      %v430 = vadd.f32 0.0, %v429
      %v431 = vpop.f32.mrf.mxu0
      %432 = vdwg.mxu0
      %433 = vst [vmem:[%s170] sm:$0x3] %v290
      %434 = vst [vmem:[%s170 + $0x2] sm:$0x3] %v360
      %435 = vst [vmem:[%s170 + $0x4] sm:$0x3] %v430
      %s436 = smul.u32 3, %s13
      %p437 = scmp.lt.s32.totalorder %s436, 5
      %s438 = scalar_select %p437, %s436, 5
      %s439 = smul.addr %s438, 2
      %s440 = scalar_lea.vmem %s2, %s439
      // Predicated region
      $region29: #{spectral_conv1d.1} parent=27 // pred_check
        %p441 = pneg %p83
      $region30: #{spectral_conv1d.1} parent=27 // pred_check_branch
        %443 = sbr.rel (%p441) target = $region32
      $region31: #{spectral_conv1d.1} parent=27 // pred_region
        %s444 = smul.u32 3, %s13
      $region32: #{spectral_conv1d.1} parent=27 // pred_fallthru
        _
    $region28: #{spectral_conv1d.1} parent=5 // pred_fallthru
      _
    %p445 = scmp.le.s32.totalorder 2, %s8
    // Predicated region
    $region33: #{spectral_conv1d.1} parent=5 // pred_check
      %p446 = pneg %p445
    $region34: #{spectral_conv1d.1} parent=5 // pred_check_branch
      %448 = sbr.rel (%p446) target = $region36
    $region35: #{spectral_conv1d.1} parent=5 // pred_region
      %s449 = ssub.s32 %s8, 2
      // Predicated region
      $region37: #{spectral_conv1d.1} parent=35 // pred_check
        %p450 = pneg %p89
      $region38: #{spectral_conv1d.1} parent=35 // pred_check_branch
        %452 = sbr.rel (%p450) target = $region40
      $region39: #{spectral_conv1d.1} parent=35 // pred_region
        %s453 = smul.u32 3, %s14
        %p454 = scmp.lt.s32.totalorder %s453, 5
        %s455 = scalar_select %p454, %s453, 5
        %s456 = smul.addr %s455, 2
        %s457 = scalar_lea.vmem %s2, %s456
      $region40: #{spectral_conv1d.1} parent=35 // pred_fallthru
        _
    $region36: #{spectral_conv1d.1} parent=5 // pred_fallthru
      _
  $region6: #{spectral_conv1d.1} parent=0 // loop_footer
    %s12 = sadd.s32 1, %s8
  $region7: #{spectral_conv1d.1} parent=0 // loop_footer_branch
    %7 = sbr.rel target = $region3
  $region8: #{spectral_conv1d.1} parent=0 // loop_exit
    _

</llo_original>
